<compile_context>
chip_gen: v5e
topology: v5e:2x2
jax: 0.10.0
libtpu: 0.0.40
codegen_flags: <defaults>
</compile_context>

<pallas_src>
import jax
import jax.numpy as jnp
from jax import lax
from jax.experimental import pallas as pl
from jax.experimental.pallas import tpu as pltpu

HIDDEN = 128
LANE = 128
SUBLANE = 8
LN_EPS = 1e-5       # nn.LayerNorm default
NEG_BIG = -1e30     # softmax mask value for padded lanes


def _round_up(x, m):
    return ((x + m - 1) // m) * m


def _make_kernel(action_dim: int):
    """action_dim is static (closed over) so lane masks are compile-time constants."""

    def kernel(x_ref, w1_ref, w2_ref, wh_ref, vecs_ref, out_ref):
        x = x_ref[...]

        # Packed per-feature vectors: rows 0..5 = b1,g1,be1,b2,g2,be2 (HIDDEN wide),
        # row 6 = fused head bias (head_pad wide), row 7 = padding.
        b1 = vecs_ref[0:1, :HIDDEN]
        g1 = vecs_ref[1:2, :HIDDEN]
        be1 = vecs_ref[2:3, :HIDDEN]
        b2 = vecs_ref[3:4, :HIDDEN]
        g2 = vecs_ref[4:5, :HIDDEN]
        be2 = vecs_ref[5:6, :HIDDEN]
        bh = vecs_ref[6:7, :]

        def ln_tanh(h, g, b):
            # Two-pass LN stats (matches the PyTorch/_ref numerics).
            mu = jnp.mean(h, axis=-1, keepdims=True)
            d = h - mu
            var = jnp.mean(d * d, axis=-1, keepdims=True)
            return jnp.tanh(d * lax.rsqrt(var + LN_EPS) * g + b)

        # ---- shared layer 1: Linear -> LayerNorm -> Tanh ----
        h = jnp.dot(x, w1_ref[...], preferred_element_type=jnp.float32) + b1
        h = ln_tanh(h, g1, be1)

        # ---- shared layer 2: Linear -> LayerNorm -> Tanh ----
        h = jnp.dot(h, w2_ref[...], preferred_element_type=jnp.float32) + b2
        h = ln_tanh(h, g2, be2)

        # ---- fused actor + critic head: one MXU pass, lane-dense result ----
        fused = jnp.dot(h, wh_ref[...], preferred_element_type=jnp.float32) + bh

        # (1, head_pad) lane index, broadcast against [tb, head_pad] results.
        lane = lax.broadcasted_iota(jnp.int32, (1, fused.shape[-1]), 1)
        actor_mask = lane < action_dim       # actor lanes
        value_mask = lane == action_dim      # critic lane

        # Softmax over the actor lanes only (padded lanes masked out).
        logits = jnp.where(actor_mask, fused, NEG_BIG)
        m = jnp.max(logits, axis=-1, keepdims=True)
        e = jnp.exp(logits - m)                 # padded lanes underflow to 0
        denom = jnp.sum(e, axis=-1, keepdims=True)
        r = pl.reciprocal(denom, approx=True)   # EUP vrcp (free slot)
        r = r * (2.0 - denom * r)               # one Newton step -> ~f32 accuracy
        probs = e * r                           # exactly 0 on all padded lanes

        # probs in lanes [0, A), critic value in lane A, zeros elsewhere.
        out_ref[...] = probs + jnp.where(value_mask, fused, 0.0)

    return kernel


def prepare_params(params):
    """One-time padding / head fusion. Call once (e.g. right after init), NOT per forward."""
    f32 = jnp.float32
    state_dim = params["w1"].shape[0]
    action_dim = params["wa"].shape[1]
    head_pad = _round_up(max(action_dim + 1, LANE), LANE)   # lane-dense fused head width

    wh_p = (jnp.zeros((HIDDEN, head_pad), f32)
            .at[:, :action_dim].set(params["wa"])
            .at[:, action_dim:action_dim + 1].set(params["wc"]))

    # Pack the seven small per-feature vectors into a single (8, head_pad) tile.
    vecs = jnp.zeros((SUBLANE, head_pad), f32)
    vecs = vecs.at[0, :HIDDEN].set(params["b1"][0])
    vecs = vecs.at[1, :HIDDEN].set(params["g1"][0])
    vecs = vecs.at[2, :HIDDEN].set(params["be1"][0])
    vecs = vecs.at[3, :HIDDEN].set(params["b2"][0])
    vecs = vecs.at[4, :HIDDEN].set(params["g2"][0])
    vecs = vecs.at[5, :HIDDEN].set(params["be2"][0])
    vecs = vecs.at[6, :action_dim].set(params["ba"][0])
    vecs = vecs.at[6, action_dim:action_dim + 1].set(params["bc"][0])

    return dict(
        w1=params["w1"].astype(f32),      # [state_dim, 128] — NO K padding
        w2=params["w2"].astype(f32),      # [128, 128]
        wh=wh_p,                          # [128, head_pad]
        vecs=vecs,                        # [8, head_pad]
        state_dim=state_dim,
        action_dim=action_dim,
        head_pad=head_pad,
    )


def actor_critic_forward(state, prep, *, batch_tile=512):
    """state: [B, state_dim] float32. `prep` = prepare_params(params).
    Returns (action_probs [B, A], value [B, 1])."""
    B, state_dim = state.shape
    assert state_dim == prep["state_dim"]
    action_dim = prep["action_dim"]
    head_pad = prep["head_pad"]
    f32 = jnp.float32

    tb = min(_round_up(batch_tile, SUBLANE), _round_up(B, SUBLANE))
    b_pad = _round_up(B, tb)

    x_p = state.astype(f32)
    if b_pad != B:
        x_p = jnp.zeros((b_pad, state_dim), f32).at[:B, :].set(x_p)

    flops = 2 * b_pad * (state_dim * HIDDEN + HIDDEN * HIDDEN + HIDDEN * head_pad)
    transcendentals = b_pad * (2 * HIDDEN + head_pad)
    bytes_accessed = 4 * (
        b_pad * state_dim + state_dim * HIDDEN + HIDDEN * HIDDEN + HIDDEN * head_pad
        + SUBLANE * head_pad + b_pad * head_pad)

    f = pl.pallas_call(
        _make_kernel(action_dim),
        out_shape=jax.ShapeDtypeStruct((b_pad, head_pad), f32),
        grid_spec=pltpu.PrefetchScalarGridSpec(
            num_scalar_prefetch=0,
            grid=(b_pad // tb,),
            in_specs=[
                pl.BlockSpec((tb, state_dim), lambda i: (i, 0)),       # state tile
                pl.BlockSpec((state_dim, HIDDEN), lambda i: (0, 0)),   # w1
                pl.BlockSpec((HIDDEN, HIDDEN), lambda i: (0, 0)),      # w2
                pl.BlockSpec((HIDDEN, head_pad), lambda i: (0, 0)),    # fused head weight
                pl.BlockSpec((SUBLANE, head_pad), lambda i: (0, 0)),   # packed vectors
            ],
            out_specs=pl.BlockSpec((tb, head_pad), lambda i: (i, 0)),
        ),
        compiler_params=pltpu.CompilerParams(dimension_semantics=("parallel",)),
        cost_estimate=pl.CostEstimate(
            flops=flops, transcendentals=transcendentals, bytes_accessed=bytes_accessed),
    )

    out = f(x_p, prep["w1"], prep["w2"], prep["wh"], prep["vecs"])

    # Single slice of the useful lanes, split afterwards (avoids re-reading the slab twice).
    head = out[:B, :action_dim + 1]
    probs = head[:, :action_dim]
    value = head[:, action_dim:action_dim + 1]
    return probs, value


def init_params(key, state_dim, action_dim):
    """PyTorch-like init: Linear U(-1/sqrt(fan_in), 1/sqrt(fan_in)); LN gamma=1, beta=0.
    Weights stored [in, out] so the kernel computes y = x @ W + b directly."""
    ks = jax.random.split(key, 8)

    def lin(kw, kb, fan_in, fan_out):
        bound = 1.0 / jnp.sqrt(float(fan_in))
        w = jax.random.uniform(kw, (fan_in, fan_out), jnp.float32, -bound, bound)
        b = jax.random.uniform(kb, (1, fan_out), jnp.float32, -bound, bound)
        return w, b

    w1, b1 = lin(ks[0], ks[1], state_dim, HIDDEN)
    w2, b2 = lin(ks[2], ks[3], HIDDEN, HIDDEN)
    wa, ba = lin(ks[4], ks[5], HIDDEN, action_dim)
    wc, bc = lin(ks[6], ks[7], HIDDEN, 1)
    return dict(
        w1=w1, b1=b1, g1=jnp.ones((1, HIDDEN), jnp.float32), be1=jnp.zeros((1, HIDDEN), jnp.float32),
        w2=w2, b2=b2, g2=jnp.ones((1, HIDDEN), jnp.float32), be2=jnp.zeros((1, HIDDEN), jnp.float32),
        wa=wa, ba=ba, wc=wc, bc=bc,
    )


def _ref_forward(state, p):
    """Pure-JAX reference for validation (matches the PyTorch module)."""
    def ln(x, g, b):
        mu = jnp.mean(x, -1, keepdims=True)
        var = jnp.mean((x - mu) ** 2, -1, keepdims=True)
        return (x - mu) / jnp.sqrt(var + LN_EPS) * g + b

    h = jnp.tanh(ln(state @ p["w1"] + p["b1"], p["g1"], p["be1"]))
    h = jnp.tanh(ln(h @ p["w2"] + p["b2"], p["g2"], p["be2"]))
    probs = jax.nn.softmax(h @ p["wa"] + p["ba"], axis=-1)
    value = h @ p["wc"] + p["bc"]
    return probs, value


if __name__ == "__main__":
    key = jax.random.PRNGKey(0)
    k_state, k_params = jax.random.split(key)

    B, STATE_DIM, ACTION_DIM = 8, 16, 8
    state = jax.random.normal(k_state, (B, STATE_DIM), jnp.float32)
    params = init_params(k_params, STATE_DIM, ACTION_DIM)
    prep = prepare_params(params)          # one-time padding / head fusion

    probs, value = actor_critic_forward(state, prep)
    probs = jax.block_until_ready(probs)
    value = jax.block_until_ready(value)

    ref_probs, ref_value = _ref_forward(state, params)
    assert probs.shape == (B, ACTION_DIM) and value.shape == (B, 1)
    assert jnp.allclose(probs, ref_probs, atol=1e-5, rtol=1e-4)
    assert jnp.allclose(value, ref_value, atol=1e-5, rtol=1e-4)
    assert jnp.allclose(jnp.sum(probs, axis=-1), 1.0, atol=1e-5)

    print("KERNEL_OK")
</pallas_src>

<mosaic_0001>
module attributes {stable_mosaic.version = 11 : i64} {
  func.func @kernel(%arg0: i32, %arg1: memref<8x16xf32, #tpu.memory_space<vmem>>, %arg2: memref<16x128xf32, #tpu.memory_space<vmem>>, %arg3: memref<128x128xf32, #tpu.memory_space<vmem>>, %arg4: memref<128x128xf32, #tpu.memory_space<vmem>>, %arg5: memref<8x128xf32, #tpu.memory_space<vmem>>, %arg6: memref<8x128xf32, #tpu.memory_space<vmem>>) attributes {dimension_semantics = [#tpu.dimension_semantics<parallel>], iteration_bounds = array<i64: 1>, scalar_prefetch = 0 : i64, scratch_operands = 0 : i64, tpu.core_type = #tpu.core_type<tc>, window_params = [{transform_indices = @transform_0, window_bounds = array<i64: 8, 16>}, {pipeline_mode = #tpu.pipeline_mode<synchronous>, transform_indices = @transform_1, window_bounds = array<i64: 16, 128>}, {pipeline_mode = #tpu.pipeline_mode<synchronous>, transform_indices = @transform_2, window_bounds = array<i64: 128, 128>}, {pipeline_mode = #tpu.pipeline_mode<synchronous>, transform_indices = @transform_3, window_bounds = array<i64: 128, 128>}, {pipeline_mode = #tpu.pipeline_mode<synchronous>, transform_indices = @transform_4, window_bounds = array<i64: 8, 128>}, {transform_indices = @transform_5, window_bounds = array<i64: 8, 128>}]} {
    %c0 = arith.constant 0 : index
    %c0_0 = arith.constant 0 : index
    %0 = vector.load %arg1[%c0, %c0_0] : memref<8x16xf32, #tpu.memory_space<vmem>>, vector<8x16xf32>
    %c0_1 = arith.constant 0 : index
    %c0_2 = arith.constant 0 : index
    %1 = vector.load %arg5[%c0_1, %c0_2] : memref<8x128xf32, #tpu.memory_space<vmem>>, vector<1x128xf32>
    %c1 = arith.constant 1 : index
    %c0_3 = arith.constant 0 : index
    %2 = vector.load %arg5[%c1, %c0_3] : memref<8x128xf32, #tpu.memory_space<vmem>>, vector<1x128xf32>
    %c2 = arith.constant 2 : index
    %c0_4 = arith.constant 0 : index
    %3 = vector.load %arg5[%c2, %c0_4] : memref<8x128xf32, #tpu.memory_space<vmem>>, vector<1x128xf32>
    %c3 = arith.constant 3 : index
    %c0_5 = arith.constant 0 : index
    %4 = vector.load %arg5[%c3, %c0_5] : memref<8x128xf32, #tpu.memory_space<vmem>>, vector<1x128xf32>
    %c4 = arith.constant 4 : index
    %c0_6 = arith.constant 0 : index
    %5 = vector.load %arg5[%c4, %c0_6] : memref<8x128xf32, #tpu.memory_space<vmem>>, vector<1x128xf32>
    %c5 = arith.constant 5 : index
    %c0_7 = arith.constant 0 : index
    %6 = vector.load %arg5[%c5, %c0_7] : memref<8x128xf32, #tpu.memory_space<vmem>>, vector<1x128xf32>
    %c6 = arith.constant 6 : index
    %c0_8 = arith.constant 0 : index
    %7 = vector.load %arg5[%c6, %c0_8] : memref<8x128xf32, #tpu.memory_space<vmem>>, vector<1x128xf32>
    %c0_9 = arith.constant 0 : index
    %c0_10 = arith.constant 0 : index
    %8 = vector.load %arg2[%c0_9, %c0_10] : memref<16x128xf32, #tpu.memory_space<vmem>>, vector<16x128xf32>
    %cst = arith.constant dense<0.000000e+00> : vector<8x128xf32>
    %9 = tpu.matmul %0, %8, %cst {dimension_numbers = #tpu.dot_dimension_numbers<[1], [0], [0], [1], [0, 0, 1, 1], [], []>} : vector<8x16xf32>, vector<16x128xf32>, vector<8x128xf32> -> vector<8x128xf32>
    %10 = vector.broadcast %1 : vector<1x128xf32> to vector<8x128xf32>
    %11 = arith.addf %9, %10 : vector<8x128xf32>
    %cst_11 = arith.constant dense<0.000000e+00> : vector<8xf32>
    %12 = vector.multi_reduction <add>, %11, %cst_11 [1] : vector<8x128xf32> to vector<8xf32>
    %13 = vector.shape_cast %12 : vector<8xf32> to vector<8x1xf32>
    %cst_12 = arith.constant 1.280000e+02 : f32
    %14 = vector.broadcast %cst_12 : f32 to vector<8x1xf32>
    %15 = arith.divf %13, %14 : vector<8x1xf32>
    %16 = vector.broadcast %15 : vector<8x1xf32> to vector<8x128xf32>
    %17 = arith.subf %11, %16 : vector<8x128xf32>
    %18 = arith.mulf %17, %17 : vector<8x128xf32>
    %cst_13 = arith.constant dense<0.000000e+00> : vector<8xf32>
    %19 = vector.multi_reduction <add>, %18, %cst_13 [1] : vector<8x128xf32> to vector<8xf32>
    %20 = vector.shape_cast %19 : vector<8xf32> to vector<8x1xf32>
    %cst_14 = arith.constant 1.280000e+02 : f32
    %21 = vector.broadcast %cst_14 : f32 to vector<8x1xf32>
    %22 = arith.divf %20, %21 : vector<8x1xf32>
    %cst_15 = arith.constant 9.99999974E-6 : f32
    %23 = vector.broadcast %cst_15 : f32 to vector<8x1xf32>
    %24 = arith.addf %22, %23 : vector<8x1xf32>
    %25 = math.rsqrt %24 : vector<8x1xf32>
    %26 = vector.broadcast %25 : vector<8x1xf32> to vector<8x128xf32>
    %27 = arith.mulf %17, %26 : vector<8x128xf32>
    %28 = vector.broadcast %2 : vector<1x128xf32> to vector<8x128xf32>
    %29 = arith.mulf %27, %28 : vector<8x128xf32>
    %30 = vector.broadcast %3 : vector<1x128xf32> to vector<8x128xf32>
    %31 = arith.addf %29, %30 : vector<8x128xf32>
    %32 = math.tanh %31 : vector<8x128xf32>
    %c0_16 = arith.constant 0 : index
    %c0_17 = arith.constant 0 : index
    %33 = vector.load %arg3[%c0_16, %c0_17] : memref<128x128xf32, #tpu.memory_space<vmem>>, vector<128x128xf32>
    %cst_18 = arith.constant dense<0.000000e+00> : vector<8x128xf32>
    %34 = tpu.matmul %32, %33, %cst_18 {dimension_numbers = #tpu.dot_dimension_numbers<[1], [0], [0], [1], [0, 0, 1, 1], [], []>} : vector<8x128xf32>, vector<128x128xf32>, vector<8x128xf32> -> vector<8x128xf32>
    %35 = vector.broadcast %4 : vector<1x128xf32> to vector<8x128xf32>
    %36 = arith.addf %34, %35 : vector<8x128xf32>
    %cst_19 = arith.constant dense<0.000000e+00> : vector<8xf32>
    %37 = vector.multi_reduction <add>, %36, %cst_19 [1] : vector<8x128xf32> to vector<8xf32>
    %38 = vector.shape_cast %37 : vector<8xf32> to vector<8x1xf32>
    %cst_20 = arith.constant 1.280000e+02 : f32
    %39 = vector.broadcast %cst_20 : f32 to vector<8x1xf32>
    %40 = arith.divf %38, %39 : vector<8x1xf32>
    %41 = vector.broadcast %40 : vector<8x1xf32> to vector<8x128xf32>
    %42 = arith.subf %36, %41 : vector<8x128xf32>
    %43 = arith.mulf %42, %42 : vector<8x128xf32>
    %cst_21 = arith.constant dense<0.000000e+00> : vector<8xf32>
    %44 = vector.multi_reduction <add>, %43, %cst_21 [1] : vector<8x128xf32> to vector<8xf32>
    %45 = vector.shape_cast %44 : vector<8xf32> to vector<8x1xf32>
    %cst_22 = arith.constant 1.280000e+02 : f32
    %46 = vector.broadcast %cst_22 : f32 to vector<8x1xf32>
    %47 = arith.divf %45, %46 : vector<8x1xf32>
    %cst_23 = arith.constant 9.99999974E-6 : f32
    %48 = vector.broadcast %cst_23 : f32 to vector<8x1xf32>
    %49 = arith.addf %47, %48 : vector<8x1xf32>
    %50 = math.rsqrt %49 : vector<8x1xf32>
    %51 = vector.broadcast %50 : vector<8x1xf32> to vector<8x128xf32>
    %52 = arith.mulf %42, %51 : vector<8x128xf32>
    %53 = vector.broadcast %5 : vector<1x128xf32> to vector<8x128xf32>
    %54 = arith.mulf %52, %53 : vector<8x128xf32>
    %55 = vector.broadcast %6 : vector<1x128xf32> to vector<8x128xf32>
    %56 = arith.addf %54, %55 : vector<8x128xf32>
    %57 = math.tanh %56 : vector<8x128xf32>
    %c0_24 = arith.constant 0 : index
    %c0_25 = arith.constant 0 : index
    %58 = vector.load %arg4[%c0_24, %c0_25] : memref<128x128xf32, #tpu.memory_space<vmem>>, vector<128x128xf32>
    %cst_26 = arith.constant dense<0.000000e+00> : vector<8x128xf32>
    %59 = tpu.matmul %57, %58, %cst_26 {dimension_numbers = #tpu.dot_dimension_numbers<[1], [0], [0], [1], [0, 0, 1, 1], [], []>} : vector<8x128xf32>, vector<128x128xf32>, vector<8x128xf32> -> vector<8x128xf32>
    %60 = vector.broadcast %7 : vector<1x128xf32> to vector<8x128xf32>
    %61 = arith.addf %59, %60 : vector<8x128xf32>
    %62 = tpu.iota {dimensions = array<i32: 1>} : vector<1x128xi32>
    %c8_i32 = arith.constant 8 : i32
    %63 = vector.broadcast %c8_i32 : i32 to vector<1x128xi32>
    %64 = arith.cmpi slt, %62, %63 : vector<1x128xi32>
    %c8_i32_27 = arith.constant 8 : i32
    %65 = vector.broadcast %c8_i32_27 : i32 to vector<1x128xi32>
    %66 = arith.cmpi eq, %62, %65 : vector<1x128xi32>
    %cst_28 = arith.constant -1.000000e+30 : f32
    %67 = vector.shape_cast %64 : vector<1x128xi1> to vector<1x128xi1>
    %68 = vector.broadcast %67 : vector<1x128xi1> to vector<8x128xi1>
    %69 = vector.broadcast %cst_28 : f32 to vector<8x128xf32>
    %70 = arith.select %68, %61, %69 : vector<8x128xi1>, vector<8x128xf32>
    %cst_29 = arith.constant dense<0xFF800000> : vector<8xf32>
    %71 = vector.multi_reduction <maximumf>, %70, %cst_29 [1] : vector<8x128xf32> to vector<8xf32>
    %72 = vector.shape_cast %71 : vector<8xf32> to vector<8x1xf32>
    %73 = vector.broadcast %72 : vector<8x1xf32> to vector<8x128xf32>
    %74 = arith.subf %70, %73 : vector<8x128xf32>
    %75 = math.exp %74 : vector<8x128xf32>
    %cst_30 = arith.constant dense<0.000000e+00> : vector<8xf32>
    %76 = vector.multi_reduction <add>, %75, %cst_30 [1] : vector<8x128xf32> to vector<8xf32>
    %77 = vector.shape_cast %76 : vector<8xf32> to vector<8x1xf32>
    %78 = tpu.reciprocal %77 {approx = true} : vector<8x1xf32> -> vector<8x1xf32>
    %79 = arith.mulf %77, %78 : vector<8x1xf32>
    %cst_31 = arith.constant 2.000000e+00 : f32
    %80 = vector.broadcast %cst_31 : f32 to vector<8x1xf32>
    %81 = arith.subf %80, %79 : vector<8x1xf32>
    %82 = arith.mulf %78, %81 : vector<8x1xf32>
    %83 = vector.broadcast %82 : vector<8x1xf32> to vector<8x128xf32>
    %84 = arith.mulf %75, %83 : vector<8x128xf32>
    %cst_32 = arith.constant 0.000000e+00 : f32
    %85 = vector.shape_cast %66 : vector<1x128xi1> to vector<1x128xi1>
    %86 = vector.broadcast %85 : vector<1x128xi1> to vector<8x128xi1>
    %87 = vector.broadcast %cst_32 : f32 to vector<8x128xf32>
    %88 = arith.select %86, %61, %87 : vector<8x128xi1>, vector<8x128xf32>
    %89 = arith.addf %84, %88 : vector<8x128xf32>
    %c0_33 = arith.constant 0 : index
    %c0_34 = arith.constant 0 : index
    %90 = vector.load %arg6[%c0_33, %c0_34] : memref<8x128xf32, #tpu.memory_space<vmem>>, vector<8x128xf32>
    tpu.vector_store %arg6[%c0_33, %c0_34], %89 {strides = array<i32>} : memref<8x128xf32, #tpu.memory_space<vmem>>, vector<8x128xf32>,
    return
  }
  func.func @transform_0(%arg0: i32) -> (i32, i32) {
    %c0_i32 = arith.constant 0 : i32
    %c0_i32_0 = arith.constant 0 : i32
    return %arg0, %c0_i32 : i32, i32
  }
  func.func @transform_1(%arg0: i32) -> (i32, i32) {
    %c0_i32 = arith.constant 0 : i32
    %c0_i32_0 = arith.constant 0 : i32
    %c0_i32_1 = arith.constant 0 : i32
    return %c0_i32, %c0_i32_0 : i32, i32
  }
  func.func @transform_2(%arg0: i32) -> (i32, i32) {
    %c0_i32 = arith.constant 0 : i32
    %c0_i32_0 = arith.constant 0 : i32
    %c0_i32_1 = arith.constant 0 : i32
    return %c0_i32, %c0_i32_0 : i32, i32
  }
  func.func @transform_3(%arg0: i32) -> (i32, i32) {
    %c0_i32 = arith.constant 0 : i32
    %c0_i32_0 = arith.constant 0 : i32
    %c0_i32_1 = arith.constant 0 : i32
    return %c0_i32, %c0_i32_0 : i32, i32
  }
  func.func @transform_4(%arg0: i32) -> (i32, i32) {
    %c0_i32 = arith.constant 0 : i32
    %c0_i32_0 = arith.constant 0 : i32
    %c0_i32_1 = arith.constant 0 : i32
    return %c0_i32, %c0_i32_0 : i32, i32
  }
  func.func @transform_5(%arg0: i32) -> (i32, i32) {
    %c0_i32 = arith.constant 0 : i32
    %c0_i32_0 = arith.constant 0 : i32
    return %arg0, %c0_i32 : i32, i32
  }
}

</mosaic_0001>

<llo_original>
// kernel: tpu_custom_call.1
$region0: #{tpu_custom_call.1}
  #allocation0 [shape = 'u32[]', space=smem, size = 0x4, offset = 0x4, fixed_abs, tag = 'smem constant byte address 0x4 - core index']
  #allocation1 [shape = 'u32[72,128]{1,0:T(1,128)}', space=vmem, size = 0x9000, scoped, tag = 'internal scratch']
  %s0 = inlined_call_operand.hbm [shape: f32[8,16], index: 0, kind: input, shape index: {}]
  %s1 = inlined_call_operand.hbm [shape: f32[16,128], index: 1, kind: input, shape index: {}]
  %s2 = inlined_call_operand.hbm [shape: f32[128,128], index: 2, kind: input, shape index: {}]
  %s3 = inlined_call_operand.hbm [shape: f32[128,128], index: 3, kind: input, shape index: {}]
  %s4 = inlined_call_operand.hbm [shape: f32[8,128], index: 4, kind: input, shape index: {}]
  %s5 = inlined_call_operand.hbm [shape: f32[8,128], index: 5, kind: output, shape index: {}]
  %s6 = sld [smem:[#allocation0]]
  $region50: #{tpu_custom_call.1} parent=0
    _
  %s8 = ssub.s32 1, %s6
  %s9 = scalar_select 0, %s8, %s6
  $region1: #{tpu_custom_call.1} parent=0
    #allocation2 [shape = 'u8[4096]{0}', space=vmem, size = 0x1000, scoped, tag = 'input window, operand 0, single buffered']
    #allocation3 [shape = 's32[1]{0}', space=sflag, size = 0x4, scoped, tag = 'scoped memory for tpu_custom_call.1']
    #allocation4 [shape = 's32[1]{0}', space=sflag, size = 0x4, scoped, tag = 'scoped memory for tpu_custom_call.1']
    #allocation5 [shape = 'u8[8192]{0}', space=vmem, size = 0x2000, scoped, tag = 'input window, operand 1, single buffered']
    #allocation6 [shape = 's32[1]{0}', space=sflag, size = 0x4, scoped, tag = 'scoped memory for tpu_custom_call.1']
    #allocation7 [shape = 'u8[65536]{0}', space=vmem, size = 0x10000, scoped, tag = 'input window, operand 2, single buffered']
    #allocation8 [shape = 'u8[65536]{0}', space=vmem, size = 0x10000, scoped, tag = 'input window, operand 3, single buffered']
    #allocation9 [shape = 's32[1]{0}', space=sflag, size = 0x4, scoped, tag = 'scoped memory for tpu_custom_call.1']
    #allocation10 [shape = 'u8[4096]{0}', space=vmem, size = 0x1000, scoped, tag = 'input window, operand 4, single buffered']
    #allocation11 [shape = 'u8[4096]{0}', space=vmem, size = 0x1000, scoped, tag = 'output window, operand 0, single buffered']
    %10 = vsyncpa [#allocation3], 0
    %11 = vsyncpa [#allocation6], 0
    %12 = vsyncpa [#allocation9], 0
    %13 = vsyncpa [#allocation4], 0
    // Predicated region
    $region2: #{tpu_custom_call.1} parent=1 // pred_check
      _
    $region3: #{tpu_custom_call.1} parent=1 // pred_check_branch
      %15 = sbr.rel (0) target = $region5
    $region4: #{tpu_custom_call.1} parent=1 // pred_region
      %17 = vsyncadd [#allocation3], 0
      %s19 = sshll.u32 %s0, 4
      %s20 = int_to_ptr.hbm [resolvable:$true] %s19
      %s21 = sshll.u32 [#allocation2], 4
      %s22 = int_to_ptr.vmem [resolvable:$true] %s21
      %24 = dma.hbm_to_vmem [thread:$0]  %s20, 128, %s22, [#allocation3]
    $region5: #{tpu_custom_call.1} parent=1 // pred_fallthru
      _
    // Predicated region
    $region6: #{tpu_custom_call.1} parent=1 // pred_check
      _
    $region7: #{tpu_custom_call.1} parent=1 // pred_check_branch
      %26 = sbr.rel (0) target = $region9
    $region8: #{tpu_custom_call.1} parent=1 // pred_region
      %28 = vsyncadd [#allocation6], 0
      %s29 = sshll.u32 %s1, 4
      %s30 = int_to_ptr.hbm [resolvable:$true] %s29
      %s31 = sshll.u32 [#allocation5], 4
      %s32 = int_to_ptr.vmem [resolvable:$true] %s31
      %37 = dma.hbm_to_vmem [thread:$0]  %s30, 256, %s32, [#allocation6], 128, 128, 8
    $region9: #{tpu_custom_call.1} parent=1 // pred_fallthru
      _
    // Predicated region
    $region10: #{tpu_custom_call.1} parent=1 // pred_check
      _
    $region11: #{tpu_custom_call.1} parent=1 // pred_check_branch
      %39 = sbr.rel (0) target = $region13
    $region12: #{tpu_custom_call.1} parent=1 // pred_region
      %41 = vsyncadd [#allocation6], 0
      %s42 = sshll.u32 %s2, 4
      %s43 = int_to_ptr.hbm [resolvable:$true] %s42
      %s44 = sshll.u32 [#allocation7], 4
      %s45 = int_to_ptr.vmem [resolvable:$true] %s44
      %50 = dma.hbm_to_vmem [thread:$0]  %s43, 2048, %s45, [#allocation6], 128, 128, 8
    $region13: #{tpu_custom_call.1} parent=1 // pred_fallthru
      _
    // Predicated region
    $region14: #{tpu_custom_call.1} parent=1 // pred_check
      _
    $region15: #{tpu_custom_call.1} parent=1 // pred_check_branch
      %52 = sbr.rel (0) target = $region17
    $region16: #{tpu_custom_call.1} parent=1 // pred_region
      %54 = vsyncadd [#allocation9], 0
      %s55 = sshll.u32 %s3, 4
      %s56 = int_to_ptr.hbm [resolvable:$true] %s55
      %s57 = sshll.u32 [#allocation8], 4
      %s58 = int_to_ptr.vmem [resolvable:$true] %s57
      %63 = dma.hbm_to_vmem [thread:$0]  %s56, 2048, %s58, [#allocation9], 128, 128, 8
    $region17: #{tpu_custom_call.1} parent=1 // pred_fallthru
      _
    // Predicated region
    $region18: #{tpu_custom_call.1} parent=1 // pred_check
      _
    $region19: #{tpu_custom_call.1} parent=1 // pred_check_branch
      %65 = sbr.rel (0) target = $region21
    $region20: #{tpu_custom_call.1} parent=1 // pred_region
      %67 = vsyncadd [#allocation9], 0
      %s69 = sshll.u32 %s4, 4
      %s70 = int_to_ptr.hbm [resolvable:$true] %s69
      %s71 = sshll.u32 [#allocation10], 4
      %s72 = int_to_ptr.vmem [resolvable:$true] %s71
      %74 = dma.hbm_to_vmem [thread:$0]  %s70, 128, %s72, [#allocation9]
    $region21: #{tpu_custom_call.1} parent=1 // pred_fallthru
      _
    // Predicated region
    $region22: #{tpu_custom_call.1} parent=1 // pred_check
      _
    $region23: #{tpu_custom_call.1} parent=1 // pred_check_branch
      %76 = sbr.rel (0) target = $region25
    $region24: #{tpu_custom_call.1} parent=1 // pred_region
      %78 = dma.done [#allocation3], 128
    $region25: #{tpu_custom_call.1} parent=1 // pred_fallthru
      _
    // Predicated region
    $region26: #{tpu_custom_call.1} parent=1 // pred_check
      _
    $region27: #{tpu_custom_call.1} parent=1 // pred_check_branch
      %80 = sbr.rel (0) target = $region29
    $region28: #{tpu_custom_call.1} parent=1 // pred_region
      %82 = dma.done [#allocation6], 256
    $region29: #{tpu_custom_call.1} parent=1 // pred_fallthru
      _
    // Predicated region
    $region30: #{tpu_custom_call.1} parent=1 // pred_check
      _
    $region31: #{tpu_custom_call.1} parent=1 // pred_check_branch
      %84 = sbr.rel (0) target = $region33
    $region32: #{tpu_custom_call.1} parent=1 // pred_region
      %86 = dma.done [#allocation6], 2048
    $region33: #{tpu_custom_call.1} parent=1 // pred_fallthru
      _
    // Predicated region
    $region34: #{tpu_custom_call.1} parent=1 // pred_check
      _
    $region35: #{tpu_custom_call.1} parent=1 // pred_check_branch
      %88 = sbr.rel (0) target = $region37
    $region36: #{tpu_custom_call.1} parent=1 // pred_region
      %90 = dma.done [#allocation9], 2048
    $region37: #{tpu_custom_call.1} parent=1 // pred_fallthru
      _
    // Predicated region
    $region38: #{tpu_custom_call.1} parent=1 // pred_check
      _
    $region39: #{tpu_custom_call.1} parent=1 // pred_check_branch
      %92 = sbr.rel (0) target = $region41
    $region40: #{tpu_custom_call.1} parent=1 // pred_region
      %94 = dma.done [#allocation9], 128
    $region41: #{tpu_custom_call.1} parent=1 // pred_fallthru
      _
    %v95 = vld [vmem:[#allocation2] sm:$0xff]
    %v96 = vld [vmem:[#allocation10] sm:$0x1]
    %v97 = vld [vmem:[#allocation10 + $0x1] sm:$0x1]
    %v98 = vld [vmem:[#allocation10 + $0x2] sm:$0x1]
    %v99 = vld [vmem:[#allocation10 + $0x3] sm:$0x1]
    %v100 = vld [vmem:[#allocation10 + $0x4] sm:$0x1]
    %v101 = vld [vmem:[#allocation10 + $0x5] sm:$0x1]
    %v102 = vld [vmem:[#allocation10 + $0x6] sm:$0x1]
    %v103 = vld [vmem:[#allocation5] sm:$0xff]
    %v104 = vld [vmem:[#allocation5 + $0x8] sm:$0xff]
    %v105 = vperm.slane %v96, 0
    %vm106 = vcmask 130048
    %v108 = vsel %vm106, %v95, 0
    %110 = vmatpush.msra.mxu0 0.0
    %111 = vmatpush.msra.mxu0 0.0
    %112 = vmatpush.msra.mxu0 0.0
    %113 = vmatpush.msra.mxu0 0.0
    %114 = vmatpush.msra.mxu0 0.0
    %115 = vmatpush.msra.mxu0 0.0
    %116 = vmatpush.msra.mxu0 0.0
    %117 = vmatpush.msra.mxu0 0.0
    %118 = vmatpush.msra.mxu0 0.0
    %119 = vmatpush.msra.mxu0 0.0
    %120 = vmatpush.msra.mxu0 0.0
    %121 = vmatpush.msra.mxu0 0.0
    %122 = vmatpush.msra.mxu0 0.0
    %123 = vmatpush.msra.mxu0 0.0
    %124 = vmatpush.msra.mxu0 %v104
    %125 = vmatpush.msra.mxu0 %v103
    %126 = vmatmul.f32.gmra.mxu0 %v108
    %v127 = vpop.f32.mrf.mxu0
    %v128 = vadd.f32 %v105, %v127
    %129 = vdwg.mxu0
    %130 = vadd.xlane.f32.xlu0 %v128
    %v131 = vpop.xlane.xlu0 %130
    %v132 = vrcp.pop 128.0
    %v133 = vmul.f32 128.0, %v132
    %v134 = vsub.f32 1.0, %v133
    %v135 = vmul.f32 %v132, %v134
    %v136 = vadd.f32 %v132, %v135
    %vm137 = vweird.f32 %v132
    %v138 = vsel %vm137, %v132, %v136
    %v139 = vmul.f32 %v131, %v138
    %v140 = vsub.f32 %v128, %v139
    %v141 = vmul.f32 %v140, %v140
    %142 = vadd.xlane.f32.xlu0 %v141
    %v143 = vpop.xlane.xlu0 %142
    %v144 = vmul.f32 %v143, %v138
    %v145 = vadd.f32 %v144, 1e-05
    %v146 = vrsqrt.pop %v145
    %v147 = vmul.f32 %v146, %v145
    %v148 = vmul.f32 %v147, %v146
    %v149 = vmul.f32 0.5, %v148
    %v150 = vsub.f32 1.5, %v149
    %v151 = vmul.f32 %v146, %v150
    %vm152 = vweird.f32 %v145
    %vm153 = vweird.f32 %v146
    %vm154 = vmor %vm152, %vm153
    %v155 = vsel %vm154, %v146, %v151
    %v156 = vmul.f32 %v140, %v155
    %v157 = vperm.slane %v97, 0
    %v158 = vmul.f32 %v156, %v157
    %v159 = vperm.slane %v98, 0
    %v160 = vadd.f32 %v158, %v159
    %v161 = vtanh.pop %v160
    %v162 = vld [vmem:[#allocation7] sm:$0xff]
    %v163 = vld [vmem:[#allocation7 + $0x8] sm:$0xff]
    %v164 = vld [vmem:[#allocation7 + $0x10] sm:$0xff]
    %v165 = vld [vmem:[#allocation7 + $0x18] sm:$0xff]
    %v166 = vld [vmem:[#allocation7 + $0x20] sm:$0xff]
    %v167 = vld [vmem:[#allocation7 + $0x28] sm:$0xff]
    %v168 = vld [vmem:[#allocation7 + $0x30] sm:$0xff]
    %v169 = vld [vmem:[#allocation7 + $0x38] sm:$0xff]
    %v170 = vld [vmem:[#allocation7 + $0x40] sm:$0xff]
    %v171 = vld [vmem:[#allocation7 + $0x48] sm:$0xff]
    %v172 = vld [vmem:[#allocation7 + $0x50] sm:$0xff]
    %v173 = vld [vmem:[#allocation7 + $0x58] sm:$0xff]
    %v174 = vld [vmem:[#allocation7 + $0x60] sm:$0xff]
    %v175 = vld [vmem:[#allocation7 + $0x68] sm:$0xff]
    %v176 = vld [vmem:[#allocation7 + $0x70] sm:$0xff]
    %v177 = vld [vmem:[#allocation7 + $0x78] sm:$0xff]
    %v178 = vperm.slane %v99, 0
    %179 = vmatpush.msra.mxu0 %v177
    %180 = vmatpush.msra.mxu0 %v176
    %181 = vmatpush.msra.mxu0 %v175
    %182 = vmatpush.msra.mxu0 %v174
    %183 = vmatpush.msra.mxu0 %v173
    %184 = vmatpush.msra.mxu0 %v172
    %185 = vmatpush.msra.mxu0 %v171
    %186 = vmatpush.msra.mxu0 %v170
    %187 = vmatpush.msra.mxu0 %v169
    %188 = vmatpush.msra.mxu0 %v168
    %189 = vmatpush.msra.mxu0 %v167
    %190 = vmatpush.msra.mxu0 %v166
    %191 = vmatpush.msra.mxu0 %v165
    %192 = vmatpush.msra.mxu0 %v164
    %193 = vmatpush.msra.mxu0 %v163
    %194 = vmatpush.msra.mxu0 %v162
    %195 = vmatmul.f32.gmra.mxu0 %v161
    %v196 = vpop.f32.mrf.mxu0
    %v197 = vadd.f32 %v178, %v196
    %198 = vdwg.mxu0
    %199 = vadd.xlane.f32.xlu0 %v197
    %v200 = vpop.xlane.xlu0 %199
    %v201 = vmul.f32 %v200, %v138
    %v202 = vsub.f32 %v197, %v201
    %v203 = vmul.f32 %v202, %v202
    %204 = vadd.xlane.f32.xlu0 %v203
    %v205 = vpop.xlane.xlu0 %204
    %v206 = vmul.f32 %v205, %v138
    %v207 = vadd.f32 %v206, 1e-05
    %v208 = vrsqrt.pop %v207
    %v209 = vmul.f32 %v208, %v207
    %v210 = vmul.f32 %v209, %v208
    %v211 = vmul.f32 0.5, %v210
    %v212 = vsub.f32 1.5, %v211
    %v213 = vmul.f32 %v208, %v212
    %vm214 = vweird.f32 %v207
    %vm215 = vweird.f32 %v208
    %vm216 = vmor %vm214, %vm215
    %v217 = vsel %vm216, %v208, %v213
    %v218 = vmul.f32 %v202, %v217
    %v219 = vperm.slane %v100, 0
    %v220 = vmul.f32 %v218, %v219
    %v221 = vperm.slane %v101, 0
    %v222 = vadd.f32 %v220, %v221
    %v223 = vtanh.pop %v222
    %v224 = vld [vmem:[#allocation8] sm:$0xff]
    %v225 = vld [vmem:[#allocation8 + $0x8] sm:$0xff]
    %v226 = vld [vmem:[#allocation8 + $0x10] sm:$0xff]
    %v227 = vld [vmem:[#allocation8 + $0x18] sm:$0xff]
    %v228 = vld [vmem:[#allocation8 + $0x20] sm:$0xff]
    %v229 = vld [vmem:[#allocation8 + $0x28] sm:$0xff]
    %v230 = vld [vmem:[#allocation8 + $0x30] sm:$0xff]
    %v231 = vld [vmem:[#allocation8 + $0x38] sm:$0xff]
    %v232 = vld [vmem:[#allocation8 + $0x40] sm:$0xff]
    %v233 = vld [vmem:[#allocation8 + $0x48] sm:$0xff]
    %v234 = vld [vmem:[#allocation8 + $0x50] sm:$0xff]
    %v235 = vld [vmem:[#allocation8 + $0x58] sm:$0xff]
    %v236 = vld [vmem:[#allocation8 + $0x60] sm:$0xff]
    %v237 = vld [vmem:[#allocation8 + $0x68] sm:$0xff]
    %v238 = vld [vmem:[#allocation8 + $0x70] sm:$0xff]
    %v239 = vld [vmem:[#allocation8 + $0x78] sm:$0xff]
    %v240 = vperm.slane %v102, 0
    %241 = vmatpush.msra.mxu0 %v239
    %242 = vmatpush.msra.mxu0 %v238
    %243 = vmatpush.msra.mxu0 %v237
    %244 = vmatpush.msra.mxu0 %v236
    %245 = vmatpush.msra.mxu0 %v235
    %246 = vmatpush.msra.mxu0 %v234
    %247 = vmatpush.msra.mxu0 %v233
    %248 = vmatpush.msra.mxu0 %v232
    %249 = vmatpush.msra.mxu0 %v231
    %250 = vmatpush.msra.mxu0 %v230
    %251 = vmatpush.msra.mxu0 %v229
    %252 = vmatpush.msra.mxu0 %v228
    %253 = vmatpush.msra.mxu0 %v227
    %254 = vmatpush.msra.mxu0 %v226
    %255 = vmatpush.msra.mxu0 %v225
    %256 = vmatpush.msra.mxu0 %v224
    %257 = vmatmul.f32.gmra.mxu0 %v223
    %v258 = vpop.f32.mrf.mxu0
    %v259 = vadd.f32 %v240, %v258
    %260 = vdwg.mxu0
    %v261 = vlaneseq
    %v262 = vand.u32 %v261, 127
    %vm263 = vcmp.lt.s32.totalorder %v262, 8
    %vm264 = vcmp.eq.s32.totalorder %v262, 8
    %v265 = vsel %vm263, 1, 0
    %vm266 = vcmp.eq.s32.totalorder %v265, 1
    %v267 = vsel %vm266, %v259, -1e+30
    %268 = vmax.xlane.f32.xlu0 %v267
    %v269 = vpop.xlane.xlu0 %268
    %v270 = vsub.f32 %v267, %v269
    %v271 = vmul.f32 %v270, 1.442695
    %v272 = vpow.pop %v271
    %273 = vadd.xlane.f32.xlu0 %v272
    %v274 = vpop.xlane.xlu0 %273
    %v275 = vrcp.pop %v274
    %v276 = vmul.f32 %v274, %v275
    %v277 = vsub.f32 2.0, %v276
    %v278 = vmul.f32 %v275, %v277
    %v279 = vmul.f32 %v272, %v278
    %v280 = vsel %vm264, 1, 0
    %vm281 = vcmp.eq.s32.totalorder %v280, 1
    %v282 = vsel %vm281, %v259, 0.0
    %v283 = vadd.f32 %v279, %v282
    %284 = vst [vmem:[#allocation11] sm:$0xff] %v283
    // Predicated region
    $region42: #{tpu_custom_call.1} parent=1 // pred_check
      _
    $region43: #{tpu_custom_call.1} parent=1 // pred_check_branch
      %286 = sbr.rel (0) target = $region45
    $region44: #{tpu_custom_call.1} parent=1 // pred_region
      %288 = vsyncadd [#allocation4], 0
      %s290 = sshll.u32 [#allocation11], 4
      %s291 = int_to_ptr.vmem [resolvable:$true] %s290
      %s292 = sshll.u32 %s5, 4
      %s293 = int_to_ptr.hbm [resolvable:$true] %s292
      %295 = dma.vmem_to_hbm [thread:$0]  %s291, 128, %s293, [#allocation4]
    $region45: #{tpu_custom_call.1} parent=1 // pred_fallthru
      _
    // Predicated region
    $region46: #{tpu_custom_call.1} parent=1 // pred_check
      _
    $region47: #{tpu_custom_call.1} parent=1 // pred_check_branch
      %297 = sbr.rel (0) target = $region49
    $region48: #{tpu_custom_call.1} parent=1 // pred_region
      %299 = dma.done [#allocation4], 128
    $region49: #{tpu_custom_call.1} parent=1 // pred_fallthru
      _
    %300 = vsyncpa [#allocation3], 1
    %301 = vsyncpa [#allocation6], 1
    %302 = vsyncpa [#allocation9], 1
    %303 = vsyncpa [#allocation4], 1

</llo_original>
